<compile_context>
chip_gen: v6e
topology: v6e:2x2x1
jax: 0.10.0
libtpu: 0.0.40
codegen_flags: <defaults>
</compile_context>

<pallas_src>
import jax
import jax.numpy as jnp
from jax.experimental import pallas as pl
from jax.experimental.pallas import tpu as pltpu

HID_SIZE = 64          # logical hidden size (matches the PyTorch module)
_HID_PAD = 128         # lane-dense padded hidden size
_LANE = 128            # output-lane padding multiple
_TB_MAX = 512          # max batch-tile rows per grid step


def _round_up(n, m):
    return ((n + m - 1) // m) * m


def _actor_mlp_kernel(x_ref, w1_ref, b1_ref, w2_ref, b2_ref, w3_ref, b3_ref, o_ref):
    # Layer 1: Linear(obs -> HID_PAD) + Tanh   (MXU in operand dtype, f32 acc,
    # bias add on the VPU and tanh on the EUP in f32).
    h = jnp.dot(x_ref[...], w1_ref[...], preferred_element_type=jnp.float32)
    h = jnp.tanh(h + b1_ref[...])
    # Layer 2: Linear(HID_PAD -> HID_PAD) + Tanh
    h = jnp.dot(h.astype(w2_ref.dtype), w2_ref[...], preferred_element_type=jnp.float32)
    h = jnp.tanh(h + b2_ref[...])
    # Layer 3: Linear(HID_PAD -> act_pad)   (no activation; this is mu)
    mu = jnp.dot(h.astype(w3_ref.dtype), w3_ref[...], preferred_element_type=jnp.float32)
    o_ref[...] = (mu + b3_ref[...]).astype(o_ref.dtype)


def _pad2(a, rows, cols):
    r, c = a.shape
    return jnp.pad(a, ((0, rows - r), (0, cols - c)))


def model_actor_forward(x, params, *, compute_dtype=jnp.float32):
    """ModelActor.forward (mu head) as a single tiled Pallas kernel.

    x: [batch, obs] float32
    params: dict with w1 [obs, HID], b1 [1, HID], w2 [HID, HID], b2 [1, HID],
            w3 [HID, act], b3 [1, act]   (weights stored as [in, out])
    compute_dtype: dtype of the matmul operands (f32, or bf16 on v6e/v7x);
                   accumulation, biases and tanh are always f32.
    returns: mu [batch, act] float32
    """
    batch, obs = x.shape
    act = params["w3"].shape[1]
    act_pad = _round_up(act, _LANE)

    # Batch tiling: one tile if the batch fits, otherwise 512-row tiles.
    tb = _round_up(batch, 8) if batch <= _TB_MAX else _TB_MAX
    batch_pad = _round_up(batch, tb)
    grid = (batch_pad // tb,)

    # Zero-pad operands (exact: padded rows/cols stay zero through the MLP).
    xp = jnp.pad(x, ((0, batch_pad - batch), (0, 0))).astype(compute_dtype)
    w1 = _pad2(params["w1"], obs, _HID_PAD).astype(compute_dtype)
    w2 = _pad2(params["w2"], _HID_PAD, _HID_PAD).astype(compute_dtype)
    w3 = _pad2(params["w3"], _HID_PAD, act_pad).astype(compute_dtype)
    b1 = _pad2(params["b1"], 1, _HID_PAD).astype(jnp.float32)
    b2 = _pad2(params["b2"], 1, _HID_PAD).astype(jnp.float32)
    b3 = _pad2(params["b3"], 1, act_pad).astype(jnp.float32)

    # Weights/biases: same block for every grid step -> VMEM-resident.
    resident = lambda shape: pl.BlockSpec(shape, lambda i: (0, 0))

    out = pl.pallas_call(
        _actor_mlp_kernel,
        out_shape=jax.ShapeDtypeStruct((batch_pad, act_pad), jnp.float32),
        grid=grid,
        in_specs=[
            pl.BlockSpec((tb, obs), lambda i: (i, 0)),   # x tile (pipelined)
            resident((obs, _HID_PAD)),
            resident((1, _HID_PAD)),
            resident((_HID_PAD, _HID_PAD)),
            resident((1, _HID_PAD)),
            resident((_HID_PAD, act_pad)),
            resident((1, act_pad)),
        ],
        out_specs=pl.BlockSpec((tb, act_pad), lambda i: (i, 0)),
        compiler_params=pltpu.CompilerParams(
            dimension_semantics=("parallel",)),   # 2x on v7x dual-TC
    )(xp, w1, b1, w2, b2, w3, b3)

    return out[:batch, :act]


def init_params(key, obs_size, act_size):
    """Deterministic init matching nn.Linear default (U[-1/sqrt(fan_in), 1/sqrt(fan_in)])."""
    ks = jax.random.split(key, 6)

    def linear(kw, kb, fan_in, fan_out):
        bound = 1.0 / jnp.sqrt(jnp.float32(fan_in))
        w = jax.random.uniform(kw, (fan_in, fan_out), jnp.float32, -bound, bound)
        b = jax.random.uniform(kb, (1, fan_out), jnp.float32, -bound, bound)
        return w, b

    w1, b1 = linear(ks[0], ks[1], obs_size, HID_SIZE)
    w2, b2 = linear(ks[2], ks[3], HID_SIZE, HID_SIZE)
    w3, b3 = linear(ks[4], ks[5], HID_SIZE, act_size)
    # logstd parameter (zeros) exists in the module but is not used in forward.
    logstd = jnp.zeros((act_size,), jnp.float32)
    return {"w1": w1, "b1": b1, "w2": w2, "b2": b2, "w3": w3, "b3": b3,
            "logstd": logstd}


if __name__ == "__main__":
    obs_size, act_size = 24, 6

    key = jax.random.PRNGKey(0)
    k_x, k_p, k_x2 = jax.random.split(key, 3)
    params = init_params(k_p, obs_size, act_size)

    def ref_fwd(x):
        h = jnp.tanh(x @ params["w1"] + params["b1"])
        h = jnp.tanh(h @ params["w2"] + params["b2"])
        return h @ params["w3"] + params["b3"]

    # Small batch (PyTorch-demo scale): f32 path, tight tolerance.
    x_small = jax.random.normal(k_x, (8, obs_size), jnp.float32)
    mu32 = jax.block_until_ready(model_actor_forward(x_small, params))
    assert mu32.shape == (8, act_size)
    assert jnp.allclose(mu32, ref_fwd(x_small), atol=1e-5, rtol=1e-5)

    # bf16 matmul-operand path (v6e/v7x), looser tolerance vs f32 reference.
    mu16 = jax.block_until_ready(
        model_actor_forward(x_small, params, compute_dtype=jnp.bfloat16))
    assert mu16.shape == (8, act_size)
    assert jnp.allclose(mu16, ref_fwd(x_small), atol=5e-2, rtol=5e-2)

    # Larger batch exercising the 512-row tiled, pipelined grid (2 tiles).
    x_big = jax.random.normal(k_x2, (1024, obs_size), jnp.float32)
    mu_big = jax.block_until_ready(model_actor_forward(x_big, params))
    assert mu_big.shape == (1024, act_size)
    assert jnp.allclose(mu_big, ref_fwd(x_big), atol=1e-5, rtol=1e-5)

    print("KERNEL_OK")
</pallas_src>

<mosaic_0001>
module attributes {stable_mosaic.version = 11 : i64} {
  func.func @_actor_mlp_kernel(%arg0: i32, %arg1: memref<8x24xf32, #tpu.memory_space<vmem>>, %arg2: memref<24x128xf32, #tpu.memory_space<vmem>>, %arg3: memref<1x128xf32, #tpu.memory_space<vmem>>, %arg4: memref<128x128xf32, #tpu.memory_space<vmem>>, %arg5: memref<1x128xf32, #tpu.memory_space<vmem>>, %arg6: memref<128x128xf32, #tpu.memory_space<vmem>>, %arg7: memref<1x128xf32, #tpu.memory_space<vmem>>, %arg8: memref<8x128xf32, #tpu.memory_space<vmem>>) attributes {dimension_semantics = [#tpu.dimension_semantics<parallel>], iteration_bounds = array<i64: 1>, scalar_prefetch = 0 : i64, scratch_operands = 0 : i64, tpu.core_type = #tpu.core_type<tc>, window_params = [{transform_indices = @transform_0, window_bounds = array<i64: 8, 24>}, {pipeline_mode = #tpu.pipeline_mode<synchronous>, transform_indices = @transform_1, window_bounds = array<i64: 24, 128>}, {pipeline_mode = #tpu.pipeline_mode<synchronous>, transform_indices = @transform_2, window_bounds = array<i64: 1, 128>}, {pipeline_mode = #tpu.pipeline_mode<synchronous>, transform_indices = @transform_3, window_bounds = array<i64: 128, 128>}, {pipeline_mode = #tpu.pipeline_mode<synchronous>, transform_indices = @transform_4, window_bounds = array<i64: 1, 128>}, {pipeline_mode = #tpu.pipeline_mode<synchronous>, transform_indices = @transform_5, window_bounds = array<i64: 128, 128>}, {pipeline_mode = #tpu.pipeline_mode<synchronous>, transform_indices = @transform_6, window_bounds = array<i64: 1, 128>}, {transform_indices = @transform_7, window_bounds = array<i64: 8, 128>}]} {
    %c0 = arith.constant 0 : index
    %c0_0 = arith.constant 0 : index
    %0 = vector.load %arg1[%c0, %c0_0] : memref<8x24xf32, #tpu.memory_space<vmem>>, vector<8x24xf32>
    %c0_1 = arith.constant 0 : index
    %c0_2 = arith.constant 0 : index
    %1 = vector.load %arg2[%c0_1, %c0_2] : memref<24x128xf32, #tpu.memory_space<vmem>>, vector<24x128xf32>
    %cst = arith.constant dense<0.000000e+00> : vector<8x128xf32>
    %2 = tpu.matmul %0, %1, %cst {dimension_numbers = #tpu.dot_dimension_numbers<[1], [0], [0], [1], [0, 0, 1, 1], [], []>} : vector<8x24xf32>, vector<24x128xf32>, vector<8x128xf32> -> vector<8x128xf32>
    %c0_3 = arith.constant 0 : index
    %c0_4 = arith.constant 0 : index
    %3 = vector.load %arg3[%c0_3, %c0_4] : memref<1x128xf32, #tpu.memory_space<vmem>>, vector<1x128xf32>
    %4 = vector.broadcast %3 : vector<1x128xf32> to vector<8x128xf32>
    %5 = arith.addf %2, %4 : vector<8x128xf32>
    %6 = math.tanh %5 : vector<8x128xf32>
    %c0_5 = arith.constant 0 : index
    %c0_6 = arith.constant 0 : index
    %7 = vector.load %arg4[%c0_5, %c0_6] : memref<128x128xf32, #tpu.memory_space<vmem>>, vector<128x128xf32>
    %cst_7 = arith.constant dense<0.000000e+00> : vector<8x128xf32>
    %8 = tpu.matmul %6, %7, %cst_7 {dimension_numbers = #tpu.dot_dimension_numbers<[1], [0], [0], [1], [0, 0, 1, 1], [], []>} : vector<8x128xf32>, vector<128x128xf32>, vector<8x128xf32> -> vector<8x128xf32>
    %c0_8 = arith.constant 0 : index
    %c0_9 = arith.constant 0 : index
    %9 = vector.load %arg5[%c0_8, %c0_9] : memref<1x128xf32, #tpu.memory_space<vmem>>, vector<1x128xf32>
    %10 = vector.broadcast %9 : vector<1x128xf32> to vector<8x128xf32>
    %11 = arith.addf %8, %10 : vector<8x128xf32>
    %12 = math.tanh %11 : vector<8x128xf32>
    %c0_10 = arith.constant 0 : index
    %c0_11 = arith.constant 0 : index
    %13 = vector.load %arg6[%c0_10, %c0_11] : memref<128x128xf32, #tpu.memory_space<vmem>>, vector<128x128xf32>
    %cst_12 = arith.constant dense<0.000000e+00> : vector<8x128xf32>
    %14 = tpu.matmul %12, %13, %cst_12 {dimension_numbers = #tpu.dot_dimension_numbers<[1], [0], [0], [1], [0, 0, 1, 1], [], []>} : vector<8x128xf32>, vector<128x128xf32>, vector<8x128xf32> -> vector<8x128xf32>
    %c0_13 = arith.constant 0 : index
    %c0_14 = arith.constant 0 : index
    %15 = vector.load %arg7[%c0_13, %c0_14] : memref<1x128xf32, #tpu.memory_space<vmem>>, vector<1x128xf32>
    %16 = vector.broadcast %15 : vector<1x128xf32> to vector<8x128xf32>
    %17 = arith.addf %14, %16 : vector<8x128xf32>
    %c0_15 = arith.constant 0 : index
    %c0_16 = arith.constant 0 : index
    %18 = vector.load %arg8[%c0_15, %c0_16] : memref<8x128xf32, #tpu.memory_space<vmem>>, vector<8x128xf32>
    tpu.vector_store %arg8[%c0_15, %c0_16], %17 {strides = array<i32>} : memref<8x128xf32, #tpu.memory_space<vmem>>, vector<8x128xf32>,
    return
  }
  func.func @transform_0(%arg0: i32) -> (i32, i32) {
    %c0_i32 = arith.constant 0 : i32
    %c0_i32_0 = arith.constant 0 : i32
    return %arg0, %c0_i32 : i32, i32
  }
  func.func @transform_1(%arg0: i32) -> (i32, i32) {
    %c0_i32 = arith.constant 0 : i32
    %c0_i32_0 = arith.constant 0 : i32
    %c0_i32_1 = arith.constant 0 : i32
    return %c0_i32, %c0_i32_0 : i32, i32
  }
  func.func @transform_2(%arg0: i32) -> (i32, i32) {
    %c0_i32 = arith.constant 0 : i32
    %c0_i32_0 = arith.constant 0 : i32
    %c0_i32_1 = arith.constant 0 : i32
    return %c0_i32, %c0_i32_0 : i32, i32
  }
  func.func @transform_3(%arg0: i32) -> (i32, i32) {
    %c0_i32 = arith.constant 0 : i32
    %c0_i32_0 = arith.constant 0 : i32
    %c0_i32_1 = arith.constant 0 : i32
    return %c0_i32, %c0_i32_0 : i32, i32
  }
  func.func @transform_4(%arg0: i32) -> (i32, i32) {
    %c0_i32 = arith.constant 0 : i32
    %c0_i32_0 = arith.constant 0 : i32
    %c0_i32_1 = arith.constant 0 : i32
    return %c0_i32, %c0_i32_0 : i32, i32
  }
  func.func @transform_5(%arg0: i32) -> (i32, i32) {
    %c0_i32 = arith.constant 0 : i32
    %c0_i32_0 = arith.constant 0 : i32
    %c0_i32_1 = arith.constant 0 : i32
    return %c0_i32, %c0_i32_0 : i32, i32
  }
  func.func @transform_6(%arg0: i32) -> (i32, i32) {
    %c0_i32 = arith.constant 0 : i32
    %c0_i32_0 = arith.constant 0 : i32
    %c0_i32_1 = arith.constant 0 : i32
    return %c0_i32, %c0_i32_0 : i32, i32
  }
  func.func @transform_7(%arg0: i32) -> (i32, i32) {
    %c0_i32 = arith.constant 0 : i32
    %c0_i32_0 = arith.constant 0 : i32
    return %arg0, %c0_i32 : i32, i32
  }
}

</mosaic_0001>

<llo_original>
// kernel: tpu_custom_call.1
$region0: #{tpu_custom_call.1}
  #allocation0 [shape = 'u32[]', space=smem, size = 0x4, offset = 0x4, fixed_abs, tag = 'smem constant byte address 0x4 - core index']
  #allocation1 [shape = 'u32[144,128]{1,0:T(1,128)}', space=vmem, size = 0x12000, scoped, tag = 'internal scratch']
  %s0 = inlined_call_operand.hbm [shape: f32[8,24], index: 0, kind: input, shape index: {}]
  %s1 = inlined_call_operand.hbm [shape: f32[24,128], index: 1, kind: input, shape index: {}]
  %s2 = inlined_call_operand.vmem [shape: f32[1,128], index: 2, kind: input, shape index: {}]
  %s3 = inlined_call_operand.hbm [shape: f32[128,128], index: 3, kind: input, shape index: {}]
  %s4 = inlined_call_operand.vmem [shape: f32[1,128], index: 4, kind: input, shape index: {}]
  %s5 = inlined_call_operand.hbm [shape: f32[128,128], index: 5, kind: input, shape index: {}]
  %s6 = inlined_call_operand.vmem [shape: f32[1,128], index: 6, kind: input, shape index: {}]
  %s7 = inlined_call_operand.hbm [shape: f32[8,128], index: 7, kind: output, shape index: {}]
  %s8 = sld [smem:[#allocation0]]
  $region54: #{tpu_custom_call.1} parent=0
    _
  %s10 = ssub.s32 1, %s8
  %s11 = scalar_select 0, %s10, %s8
  $region1: #{tpu_custom_call.1} parent=0
    #allocation2 [shape = 'u8[4096]{0}', space=vmem, size = 0x1000, scoped, tag = 'input window, operand 0, single buffered']
    #allocation3 [shape = 's32[1]{0}', space=sflag, size = 0x4, scoped, tag = 'scoped memory for tpu_custom_call.1']
    #allocation4 [shape = 's32[1]{0}', space=sflag, size = 0x4, scoped, tag = 'scoped memory for tpu_custom_call.1']
    #allocation5 [shape = 'u8[12288]{0}', space=vmem, size = 0x3000, scoped, tag = 'input window, operand 1, single buffered']
    #allocation6 [shape = 's32[1]{0}', space=sflag, size = 0x4, scoped, tag = 'scoped memory for tpu_custom_call.1']
    #allocation7 [shape = 'u8[65536]{0}', space=vmem, size = 0x10000, scoped, tag = 'input window, operand 3, single buffered']
    #allocation8 [shape = 'u8[65536]{0}', space=vmem, size = 0x10000, scoped, tag = 'input window, operand 5, single buffered']
    #allocation9 [shape = 's32[1]{0}', space=sflag, size = 0x4, scoped, tag = 'scoped memory for tpu_custom_call.1']
    #allocation10 [shape = 'u8[4096]{0}', space=vmem, size = 0x1000, scoped, tag = 'output window, operand 0, single buffered']
    %12 = vsyncpa [#allocation3], 0
    %13 = vsyncpa [#allocation6], 0
    %14 = vsyncpa [#allocation9], 0
    %15 = vsyncpa [#allocation4], 0
    // Predicated region
    $region2: #{tpu_custom_call.1} parent=1 // pred_check
      _
    $region3: #{tpu_custom_call.1} parent=1 // pred_check_branch
      %17 = sbr.rel (0) target = $region5
    $region4: #{tpu_custom_call.1} parent=1 // pred_region
      %s19 = ssub.s32 128, 128
      %20 = vsyncadd [#allocation3], %s19
      %s22 = sshll.u32 [#allocation2], 4
      %s23 = int_to_ptr.vmem [resolvable:$true] %s22
      %25 = dma.hbm_to_vmem [thread:$0]  %s0, 128, %s23, [#allocation3]
    $region5: #{tpu_custom_call.1} parent=1 // pred_fallthru
      _
    // Predicated region
    $region6: #{tpu_custom_call.1} parent=1 // pred_check
      _
    $region7: #{tpu_custom_call.1} parent=1 // pred_check_branch
      %27 = sbr.rel (0) target = $region9
    $region8: #{tpu_custom_call.1} parent=1 // pred_region
      %s29 = ssub.s32 384, 384
      %30 = vsyncadd [#allocation6], %s29
      %s31 = sshll.u32 [#allocation5], 4
      %s32 = int_to_ptr.vmem [resolvable:$true] %s31
      %37 = dma.hbm_to_vmem [thread:$0]  %s1, 384, %s32, [#allocation6], 128, 128, 8
    $region9: #{tpu_custom_call.1} parent=1 // pred_fallthru
      _
    // Predicated region
    $region10: #{tpu_custom_call.1} parent=1 // pred_check
      _
    $region11: #{tpu_custom_call.1} parent=1 // pred_check_branch
      %39 = sbr.rel (0) target = $region13
    $region12: #{tpu_custom_call.1} parent=1 // pred_region
      _
    $region13: #{tpu_custom_call.1} parent=1 // pred_fallthru
      _
    // Predicated region
    $region14: #{tpu_custom_call.1} parent=1 // pred_check
      _
    $region15: #{tpu_custom_call.1} parent=1 // pred_check_branch
      %41 = sbr.rel (0) target = $region17
    $region16: #{tpu_custom_call.1} parent=1 // pred_region
      %s43 = ssub.s32 2048, 2048
      %44 = vsyncadd [#allocation6], %s43
      %s45 = sshll.u32 [#allocation7], 4
      %s46 = int_to_ptr.vmem [resolvable:$true] %s45
      %51 = dma.hbm_to_vmem [thread:$0]  %s3, 2048, %s46, [#allocation6], 128, 128, 8
    $region17: #{tpu_custom_call.1} parent=1 // pred_fallthru
      _
    // Predicated region
    $region18: #{tpu_custom_call.1} parent=1 // pred_check
      _
    $region19: #{tpu_custom_call.1} parent=1 // pred_check_branch
      %53 = sbr.rel (0) target = $region21
    $region20: #{tpu_custom_call.1} parent=1 // pred_region
      _
    $region21: #{tpu_custom_call.1} parent=1 // pred_fallthru
      _
    // Predicated region
    $region22: #{tpu_custom_call.1} parent=1 // pred_check
      _
    $region23: #{tpu_custom_call.1} parent=1 // pred_check_branch
      %55 = sbr.rel (0) target = $region25
    $region24: #{tpu_custom_call.1} parent=1 // pred_region
      %s57 = ssub.s32 2048, 2048
      %58 = vsyncadd [#allocation9], %s57
      %s59 = sshll.u32 [#allocation8], 4
      %s60 = int_to_ptr.vmem [resolvable:$true] %s59
      %65 = dma.hbm_to_vmem [thread:$0]  %s5, 2048, %s60, [#allocation9], 128, 128, 8
    $region25: #{tpu_custom_call.1} parent=1 // pred_fallthru
      _
    // Predicated region
    $region26: #{tpu_custom_call.1} parent=1 // pred_check
      _
    $region27: #{tpu_custom_call.1} parent=1 // pred_check_branch
      %67 = sbr.rel (0) target = $region29
    $region28: #{tpu_custom_call.1} parent=1 // pred_region
      _
    $region29: #{tpu_custom_call.1} parent=1 // pred_fallthru
      _
    // Predicated region
    $region30: #{tpu_custom_call.1} parent=1 // pred_check
      _
    $region31: #{tpu_custom_call.1} parent=1 // pred_check_branch
      %69 = sbr.rel (0) target = $region33
    $region32: #{tpu_custom_call.1} parent=1 // pred_region
      %70 = dma.done [#allocation3], 128
    $region33: #{tpu_custom_call.1} parent=1 // pred_fallthru
      _
    // Predicated region
    $region34: #{tpu_custom_call.1} parent=1 // pred_check
      _
    $region35: #{tpu_custom_call.1} parent=1 // pred_check_branch
      %72 = sbr.rel (0) target = $region37
    $region36: #{tpu_custom_call.1} parent=1 // pred_region
      %73 = dma.done [#allocation6], 384
    $region37: #{tpu_custom_call.1} parent=1 // pred_fallthru
      _
    // Predicated region
    $region38: #{tpu_custom_call.1} parent=1 // pred_check
      _
    $region39: #{tpu_custom_call.1} parent=1 // pred_check_branch
      %75 = sbr.rel (0) target = $region41
    $region40: #{tpu_custom_call.1} parent=1 // pred_region
      %76 = dma.done [#allocation6], 2048
    $region41: #{tpu_custom_call.1} parent=1 // pred_fallthru
      _
    // Predicated region
    $region42: #{tpu_custom_call.1} parent=1 // pred_check
      _
    $region43: #{tpu_custom_call.1} parent=1 // pred_check_branch
      %78 = sbr.rel (0) target = $region45
    $region44: #{tpu_custom_call.1} parent=1 // pred_region
      %79 = dma.done [#allocation9], 2048
    $region45: #{tpu_custom_call.1} parent=1 // pred_fallthru
      _
    %v80 = vld [vmem:[#allocation2] sm:$0xff]
    %v81 = vld [vmem:[#allocation5] sm:$0xff]
    %v82 = vld [vmem:[#allocation5 + $0x8] sm:$0xff]
    %v83 = vld [vmem:[#allocation5 + $0x10] sm:$0xff]
    %v84 = vld [vmem:[%s2] sm:$0x1]
    %v86 = vlaneseq
    %v87 = vshrl.u32 %v86, 7
    %v88 = vsub.s32 0, %v87
    %v89 = vrot.slane %v84, %v88
    %vm91 = vcmask 195584
    %v93 = vsel %vm91, %v80, 0
    %95 = vmatprep.subr.mxu0 0.0
    %96 = vmatpush1.msra.mxu0 0.0
    %97 = vmatprep.subr.mxu0 0.0
    %98 = vmatpush1.msra.mxu0 0.0
    %99 = vmatprep.subr.mxu0 0.0
    %100 = vmatpush1.msra.mxu0 0.0
    %101 = vmatprep.subr.mxu0 0.0
    %102 = vmatpush1.msra.mxu0 0.0
    %103 = vmatprep.subr.mxu0 0.0
    %104 = vmatpush1.msra.mxu0 0.0
    %105 = vmatprep.subr.mxu0 0.0
    %106 = vmatpush1.msra.mxu0 0.0
    %107 = vmatprep.subr.mxu0 0.0
    %108 = vmatpush1.msra.mxu0 0.0
    %109 = vmatprep.subr.mxu0 0.0
    %110 = vmatpush1.msra.mxu0 0.0
    %111 = vmatprep.subr.mxu0 0.0
    %112 = vmatpush1.msra.mxu0 0.0
    %113 = vmatprep.subr.mxu0 0.0
    %114 = vmatpush1.msra.mxu0 0.0
    %115 = vmatprep.subr.mxu0 0.0
    %116 = vmatpush1.msra.mxu0 0.0
    %117 = vmatprep.subr.mxu0 0.0
    %118 = vmatpush1.msra.mxu0 0.0
    %119 = vmatprep.subr.mxu0 0.0
    %120 = vmatpush1.msra.mxu0 0.0
    %121 = vmatprep.subr.mxu0 0.0
    %122 = vmatpush1.msra.mxu0 %v83
    %123 = vmatprep.subr.mxu0 0.0
    %124 = vmatpush1.msra.mxu0 %v82
    %125 = vmatprep.subr.mxu0 0.0
    %126 = vmatpush1.msra.mxu0 %v81
    %127 = vmatprep.subr.mxu0 0.0
    %128 = vmatpush2.msra.mxu0 0.0
    %129 = vmatprep.subr.mxu0 0.0
    %130 = vmatpush2.msra.mxu0 0.0
    %131 = vmatprep.subr.mxu0 0.0
    %132 = vmatpush2.msra.mxu0 0.0
    %133 = vmatprep.subr.mxu0 0.0
    %134 = vmatpush2.msra.mxu0 0.0
    %135 = vmatprep.subr.mxu0 0.0
    %136 = vmatpush2.msra.mxu0 0.0
    %137 = vmatprep.subr.mxu0 0.0
    %138 = vmatpush2.msra.mxu0 0.0
    %139 = vmatprep.subr.mxu0 0.0
    %140 = vmatpush2.msra.mxu0 0.0
    %141 = vmatprep.subr.mxu0 0.0
    %142 = vmatpush2.msra.mxu0 0.0
    %143 = vmatprep.subr.mxu0 0.0
    %144 = vmatpush2.msra.mxu0 0.0
    %145 = vmatprep.subr.mxu0 0.0
    %146 = vmatpush2.msra.mxu0 0.0
    %147 = vmatprep.subr.mxu0 0.0
    %148 = vmatpush2.msra.mxu0 0.0
    %149 = vmatprep.subr.mxu0 0.0
    %150 = vmatpush2.msra.mxu0 0.0
    %151 = vmatprep.subr.mxu0 0.0
    %152 = vmatpush2.msra.mxu0 0.0
    %153 = vmatprep.subr.mxu0 0.0
    %154 = vmatpush2.msra.mxu0 0.0
    %155 = vmatprep.subr.mxu0 0.0
    %156 = vmatpush2.msra.mxu0 0.0
    %157 = vmatprep.subr.mxu0 0.0
    %158 = vmatpush2.msra.mxu0 0.0
    %159 = vmatprep.mubr.f32.mxu0 0.0
    %160 = vmatmul.mubr.f32.gmra.mxu0 %v93
    %v161 = vpop.f32.mrf.mxu0
    %v162 = vadd.f32 %v89, %v161
    %v163 = vpop.f32.mrf.mxu0
    %164 = vdwg.mxu0
    %v165 = vtanh.pop %v162
    %v166 = vld [vmem:[#allocation7] sm:$0xff]
    %v167 = vld [vmem:[#allocation7 + $0x8] sm:$0xff]
    %v168 = vld [vmem:[#allocation7 + $0x10] sm:$0xff]
    %v169 = vld [vmem:[#allocation7 + $0x18] sm:$0xff]
    %v170 = vld [vmem:[#allocation7 + $0x20] sm:$0xff]
    %v171 = vld [vmem:[#allocation7 + $0x28] sm:$0xff]
    %v172 = vld [vmem:[#allocation7 + $0x30] sm:$0xff]
    %v173 = vld [vmem:[#allocation7 + $0x38] sm:$0xff]
    %v174 = vld [vmem:[#allocation7 + $0x40] sm:$0xff]
    %v175 = vld [vmem:[#allocation7 + $0x48] sm:$0xff]
    %v176 = vld [vmem:[#allocation7 + $0x50] sm:$0xff]
    %v177 = vld [vmem:[#allocation7 + $0x58] sm:$0xff]
    %v178 = vld [vmem:[#allocation7 + $0x60] sm:$0xff]
    %v179 = vld [vmem:[#allocation7 + $0x68] sm:$0xff]
    %v180 = vld [vmem:[#allocation7 + $0x70] sm:$0xff]
    %v181 = vld [vmem:[#allocation7 + $0x78] sm:$0xff]
    %v182 = vld [vmem:[%s4] sm:$0x1]
    %v184 = vlaneseq
    %v185 = vshrl.u32 %v184, 7
    %v186 = vsub.s32 0, %v185
    %v187 = vrot.slane %v182, %v186
    %189 = vmatprep.subr.mxu0 0.0
    %190 = vmatpush1.msra.mxu0 %v181
    %191 = vmatprep.subr.mxu0 0.0
    %192 = vmatpush1.msra.mxu0 %v180
    %193 = vmatprep.subr.mxu0 0.0
    %194 = vmatpush1.msra.mxu0 %v179
    %195 = vmatprep.subr.mxu0 0.0
    %196 = vmatpush1.msra.mxu0 %v178
    %197 = vmatprep.subr.mxu0 0.0
    %198 = vmatpush1.msra.mxu0 %v177
    %199 = vmatprep.subr.mxu0 0.0
    %200 = vmatpush1.msra.mxu0 %v176
    %201 = vmatprep.subr.mxu0 0.0
    %202 = vmatpush1.msra.mxu0 %v175
    %203 = vmatprep.subr.mxu0 0.0
    %204 = vmatpush1.msra.mxu0 %v174
    %205 = vmatprep.subr.mxu0 0.0
    %206 = vmatpush1.msra.mxu0 %v173
    %207 = vmatprep.subr.mxu0 0.0
    %208 = vmatpush1.msra.mxu0 %v172
    %209 = vmatprep.subr.mxu0 0.0
    %210 = vmatpush1.msra.mxu0 %v171
    %211 = vmatprep.subr.mxu0 0.0
    %212 = vmatpush1.msra.mxu0 %v170
    %213 = vmatprep.subr.mxu0 0.0
    %214 = vmatpush1.msra.mxu0 %v169
    %215 = vmatprep.subr.mxu0 0.0
    %216 = vmatpush1.msra.mxu0 %v168
    %217 = vmatprep.subr.mxu0 0.0
    %218 = vmatpush1.msra.mxu0 %v167
    %219 = vmatprep.subr.mxu0 0.0
    %220 = vmatpush1.msra.mxu0 %v166
    %221 = vmatprep.subr.mxu0 0.0
    %222 = vmatpush2.msra.mxu0 0.0
    %223 = vmatprep.subr.mxu0 0.0
    %224 = vmatpush2.msra.mxu0 0.0
    %225 = vmatprep.subr.mxu0 0.0
    %226 = vmatpush2.msra.mxu0 0.0
    %227 = vmatprep.subr.mxu0 0.0
    %228 = vmatpush2.msra.mxu0 0.0
    %229 = vmatprep.subr.mxu0 0.0
    %230 = vmatpush2.msra.mxu0 0.0
    %231 = vmatprep.subr.mxu0 0.0
    %232 = vmatpush2.msra.mxu0 0.0
    %233 = vmatprep.subr.mxu0 0.0
    %234 = vmatpush2.msra.mxu0 0.0
    %235 = vmatprep.subr.mxu0 0.0
    %236 = vmatpush2.msra.mxu0 0.0
    %237 = vmatprep.subr.mxu0 0.0
    %238 = vmatpush2.msra.mxu0 0.0
    %239 = vmatprep.subr.mxu0 0.0
    %240 = vmatpush2.msra.mxu0 0.0
    %241 = vmatprep.subr.mxu0 0.0
    %242 = vmatpush2.msra.mxu0 0.0
    %243 = vmatprep.subr.mxu0 0.0
    %244 = vmatpush2.msra.mxu0 0.0
    %245 = vmatprep.subr.mxu0 0.0
    %246 = vmatpush2.msra.mxu0 0.0
    %247 = vmatprep.subr.mxu0 0.0
    %248 = vmatpush2.msra.mxu0 0.0
    %249 = vmatprep.subr.mxu0 0.0
    %250 = vmatpush2.msra.mxu0 0.0
    %251 = vmatprep.subr.mxu0 0.0
    %252 = vmatpush2.msra.mxu0 0.0
    %253 = vmatprep.mubr.f32.mxu0 0.0
    %254 = vmatmul.mubr.f32.gmra.mxu0 %v165
    %v255 = vpop.f32.mrf.mxu0
    %v256 = vadd.f32 %v187, %v255
    %v257 = vpop.f32.mrf.mxu0
    %258 = vdwg.mxu0
    %v259 = vtanh.pop %v256
    %v260 = vld [vmem:[#allocation8] sm:$0xff]
    %v261 = vld [vmem:[#allocation8 + $0x8] sm:$0xff]
    %v262 = vld [vmem:[#allocation8 + $0x10] sm:$0xff]
    %v263 = vld [vmem:[#allocation8 + $0x18] sm:$0xff]
    %v264 = vld [vmem:[#allocation8 + $0x20] sm:$0xff]
    %v265 = vld [vmem:[#allocation8 + $0x28] sm:$0xff]
    %v266 = vld [vmem:[#allocation8 + $0x30] sm:$0xff]
    %v267 = vld [vmem:[#allocation8 + $0x38] sm:$0xff]
    %v268 = vld [vmem:[#allocation8 + $0x40] sm:$0xff]
    %v269 = vld [vmem:[#allocation8 + $0x48] sm:$0xff]
    %v270 = vld [vmem:[#allocation8 + $0x50] sm:$0xff]
    %v271 = vld [vmem:[#allocation8 + $0x58] sm:$0xff]
    %v272 = vld [vmem:[#allocation8 + $0x60] sm:$0xff]
    %v273 = vld [vmem:[#allocation8 + $0x68] sm:$0xff]
    %v274 = vld [vmem:[#allocation8 + $0x70] sm:$0xff]
    %v275 = vld [vmem:[#allocation8 + $0x78] sm:$0xff]
    %v276 = vld [vmem:[%s6] sm:$0x1]
    %v278 = vlaneseq
    %v279 = vshrl.u32 %v278, 7
    %v280 = vsub.s32 0, %v279
    %v281 = vrot.slane %v276, %v280
    %283 = vmatprep.subr.mxu0 0.0
    %284 = vmatpush1.msra.mxu0 %v275
    %285 = vmatprep.subr.mxu0 0.0
    %286 = vmatpush1.msra.mxu0 %v274
    %287 = vmatprep.subr.mxu0 0.0
    %288 = vmatpush1.msra.mxu0 %v273
    %289 = vmatprep.subr.mxu0 0.0
    %290 = vmatpush1.msra.mxu0 %v272
    %291 = vmatprep.subr.mxu0 0.0
    %292 = vmatpush1.msra.mxu0 %v271
    %293 = vmatprep.subr.mxu0 0.0
    %294 = vmatpush1.msra.mxu0 %v270
    %295 = vmatprep.subr.mxu0 0.0
    %296 = vmatpush1.msra.mxu0 %v269
    %297 = vmatprep.subr.mxu0 0.0
    %298 = vmatpush1.msra.mxu0 %v268
    %299 = vmatprep.subr.mxu0 0.0
    %300 = vmatpush1.msra.mxu0 %v267
    %301 = vmatprep.subr.mxu0 0.0
    %302 = vmatpush1.msra.mxu0 %v266
    %303 = vmatprep.subr.mxu0 0.0
    %304 = vmatpush1.msra.mxu0 %v265
    %305 = vmatprep.subr.mxu0 0.0
    %306 = vmatpush1.msra.mxu0 %v264
    %307 = vmatprep.subr.mxu0 0.0
    %308 = vmatpush1.msra.mxu0 %v263
    %309 = vmatprep.subr.mxu0 0.0
    %310 = vmatpush1.msra.mxu0 %v262
    %311 = vmatprep.subr.mxu0 0.0
    %312 = vmatpush1.msra.mxu0 %v261
    %313 = vmatprep.subr.mxu0 0.0
    %314 = vmatpush1.msra.mxu0 %v260
    %315 = vmatprep.subr.mxu0 0.0
    %316 = vmatpush2.msra.mxu0 0.0
    %317 = vmatprep.subr.mxu0 0.0
    %318 = vmatpush2.msra.mxu0 0.0
    %319 = vmatprep.subr.mxu0 0.0
    %320 = vmatpush2.msra.mxu0 0.0
    %321 = vmatprep.subr.mxu0 0.0
    %322 = vmatpush2.msra.mxu0 0.0
    %323 = vmatprep.subr.mxu0 0.0
    %324 = vmatpush2.msra.mxu0 0.0
    %325 = vmatprep.subr.mxu0 0.0
    %326 = vmatpush2.msra.mxu0 0.0
    %327 = vmatprep.subr.mxu0 0.0
    %328 = vmatpush2.msra.mxu0 0.0
    %329 = vmatprep.subr.mxu0 0.0
    %330 = vmatpush2.msra.mxu0 0.0
    %331 = vmatprep.subr.mxu0 0.0
    %332 = vmatpush2.msra.mxu0 0.0
    %333 = vmatprep.subr.mxu0 0.0
    %334 = vmatpush2.msra.mxu0 0.0
    %335 = vmatprep.subr.mxu0 0.0
    %336 = vmatpush2.msra.mxu0 0.0
    %337 = vmatprep.subr.mxu0 0.0
    %338 = vmatpush2.msra.mxu0 0.0
    %339 = vmatprep.subr.mxu0 0.0
    %340 = vmatpush2.msra.mxu0 0.0
    %341 = vmatprep.subr.mxu0 0.0
    %342 = vmatpush2.msra.mxu0 0.0
    %343 = vmatprep.subr.mxu0 0.0
    %344 = vmatpush2.msra.mxu0 0.0
    %345 = vmatprep.subr.mxu0 0.0
    %346 = vmatpush2.msra.mxu0 0.0
    %347 = vmatprep.mubr.f32.mxu0 0.0
    %348 = vmatmul.mubr.f32.gmra.mxu0 %v259
    %v349 = vpop.f32.mrf.mxu0
    %v350 = vadd.f32 %v281, %v349
    %v351 = vpop.f32.mrf.mxu0
    %352 = vdwg.mxu0
    %353 = vst [vmem:[#allocation10] sm:$0xff] %v350
    // Predicated region
    $region46: #{tpu_custom_call.1} parent=1 // pred_check
      _
    $region47: #{tpu_custom_call.1} parent=1 // pred_check_branch
      %355 = sbr.rel (0) target = $region49
    $region48: #{tpu_custom_call.1} parent=1 // pred_region
      %s357 = ssub.s32 128, 128
      %358 = vsyncadd [#allocation4], %s357
      %s360 = sshll.u32 [#allocation10], 4
      %s361 = int_to_ptr.vmem [resolvable:$true] %s360
      %363 = dma.vmem_to_hbm [thread:$0]  %s361, 128, %s7, [#allocation4]
    $region49: #{tpu_custom_call.1} parent=1 // pred_fallthru
      _
    // Predicated region
    $region50: #{tpu_custom_call.1} parent=1 // pred_check
      _
    $region51: #{tpu_custom_call.1} parent=1 // pred_check_branch
      %365 = sbr.rel (0) target = $region53
    $region52: #{tpu_custom_call.1} parent=1 // pred_region
      %366 = dma.done [#allocation4], 128
    $region53: #{tpu_custom_call.1} parent=1 // pred_fallthru
      _
    %367 = vsyncpa [#allocation3], 1
    %368 = vsyncpa [#allocation6], 1
    %369 = vsyncpa [#allocation9], 1
    %370 = vsyncpa [#allocation4], 1

</llo_original>
